<compile_context>
chip_gen: v7x
topology: tpu7x:2x2x1
jax: 0.10.0
libtpu: 0.0.40
codegen_flags: <defaults>
</compile_context>

<pallas_src>
import functools

import jax
import jax.numpy as jnp
from jax.experimental import pallas as pl
from jax.experimental.pallas import tpu as pltpu


# ----------------------------------------------------------------------------
# Fused Pallas kernel: stem + heads + BBoxTransform + ClipBoxes + sigmoid
# ----------------------------------------------------------------------------
def _efficientdet_fused_kernel(xp_ref, stem_w_ref, stem_b_ref,
                               head_w_ref, head_b_ref,
                               anc_ctr_ref, anc_sz_ref,
                               boxes_ref, scores_ref,
                               *, img_h, img_w, n_cls):
    # ---- stem (stride-4 conv as matmul) + ReLU, kept in registers/VMEM ----
    feat = jnp.dot(xp_ref[...], stem_w_ref[...], preferred_element_type=jnp.float32)
    feat = jnp.maximum(feat + stem_b_ref[...], 0.0)                      # (L, F)

    # ---- merged classification + regression head: single MXU pass ----
    # head layout (lanes): [ cls (n_cls) | d_ctr (n_reg) | d_sz (n_reg) ]
    heads = jnp.dot(feat, head_w_ref[...], preferred_element_type=jnp.float32)
    heads = heads + head_b_ref[...]                                      # (L, n_cls + 2*n_reg)

    n_reg = anc_ctr_ref.shape[1]
    cls = heads[:, :n_cls]                                   # (L, NA*K) lane-dense
    d_ctr = heads[:, n_cls:n_cls + n_reg]                    # per anchor: [dx, dy, dx, dy]
    d_sz = heads[:, n_cls + n_reg:n_cls + 2 * n_reg]         # per anchor: [dw, dh, dw, dh]

    anc_ctr = anc_ctr_ref[...]                               # per anchor: [cx, cy, cx, cy]
    anc_sz = anc_sz_ref[...]                                 # per anchor: [wa, ha, wa, ha]

    # ---- BBoxTransform (pure lane-wise math, no cross-lane movement) ----
    centers = d_ctr * anc_sz + anc_ctr                       # [x_ctr, y_ctr, x_ctr, y_ctr]
    sizes = jnp.exp(d_sz) * anc_sz                           # [w,     h,     w,     h    ]

    lane = jax.lax.broadcasted_iota(jnp.int32, centers.shape, 1)
    is_min = (lane % 4) < 2                                  # lanes 0,1 -> xmin,ymin; 2,3 -> xmax,ymax
    half = jnp.where(is_min, -0.5, 0.5)
    raw = centers + half * sizes                             # [xmin, ymin, xmax, ymax]

    # ---- ClipBoxes: mins clamped to >= 0, maxes clamped to <= (W-1 | H-1) ----
    hi = jnp.where(lane % 2 == 0, float(img_w - 1), float(img_h - 1))   # even lanes = x, odd = y
    boxes = jnp.where(is_min, jnp.maximum(raw, 0.0), jnp.minimum(raw, hi))

    boxes_ref[...] = boxes
    # ---- classification sigmoid, stored in lane-dense head layout ----
    scores_ref[...] = jax.nn.sigmoid(cls)


def efficientdet_forward(params, anc_ctr, anc_sz, x, *, num_anchors, num_classes, stride):
    """Mirrors EfficientDetWithPostProcess.forward for batch size 1."""
    B, C, H, W = x.shape
    assert B == 1, "squeeze(0) semantics of the torch module imply batch == 1"
    fh, fw = H // stride, W // stride
    L = fh * fw
    n_cls = num_anchors * num_classes
    n_reg = num_anchors * 4

    # im2col for the stride-4 stem conv (tiny, done once before the single kernel launch)
    xp = x.reshape(B, C, fh, stride, fw, stride)
    xp = jnp.transpose(xp, (0, 2, 4, 1, 3, 5)).reshape(L, C * stride * stride)

    vmem = lambda: pl.BlockSpec(memory_space=pltpu.MemorySpace.VMEM)
    boxes_head, scores_head = pl.pallas_call(
        functools.partial(_efficientdet_fused_kernel, img_h=H, img_w=W, n_cls=n_cls),
        out_shape=(
            jax.ShapeDtypeStruct((L, n_reg), jnp.float32),   # boxes in head layout
            jax.ShapeDtypeStruct((L, n_cls), jnp.float32),   # scores in head layout
        ),
        in_specs=[vmem() for _ in range(7)],
        out_specs=(vmem(), vmem()),
    )(xp, params["stem_w"], params["stem_b"], params["head_w"], params["head_b"],
      anc_ctr, anc_sz)

    A = L * num_anchors
    # Pure row-major reinterpretations (no transpose / data movement).
    return boxes_head.reshape(A, 4), scores_head.reshape(A, num_classes)


# ----------------------------------------------------------------------------
# Synthetic backbone parameters, anchors and the fused/permuted head layout
# ----------------------------------------------------------------------------
def make_anchors(img_h, img_w, stride=4, base_size=16.0):
    """Anchors in (y1, x1, y2, x2), shape (fh*fw*9, 4), location-major ordering."""
    scales = jnp.array([1.0, 2.0 ** (1.0 / 3.0), 2.0 ** (2.0 / 3.0)], jnp.float32)
    ratios = jnp.array([0.5, 1.0, 2.0], jnp.float32)
    fh, fw = img_h // stride, img_w // stride
    ys = (jnp.arange(fh, dtype=jnp.float32) + 0.5) * stride
    xs = (jnp.arange(fw, dtype=jnp.float32) + 0.5) * stride
    cy, cx = jnp.meshgrid(ys, xs, indexing="ij")
    scl, rat = jnp.meshgrid(scales, ratios, indexing="ij")
    scl, rat = scl.reshape(-1), rat.reshape(-1)
    h = base_size * scl * jnp.sqrt(rat)
    w = base_size * scl / jnp.sqrt(rat)
    cy, cx = cy.reshape(-1, 1), cx.reshape(-1, 1)
    y1, x1, y2, x2 = cy - h * 0.5, cx - w * 0.5, cy + h * 0.5, cx + w * 0.5
    return jnp.stack([y1, x1, y2, x2], axis=-1).reshape(-1, 4)


def build_anchor_constants(img_h, img_w, stride, base_size, num_anchors):
    """Precompute anchor centers/sizes already in the kernel's (L, NA*4) lane layout."""
    anchors = make_anchors(img_h, img_w, stride, base_size)          # (A, 4) yxyx
    y1, x1, y2, x2 = anchors[:, 0], anchors[:, 1], anchors[:, 2], anchors[:, 3]
    cy, cx = (y1 + y2) * 0.5, (x1 + x2) * 0.5
    ha, wa = y2 - y1, x2 - x1
    L = (img_h // stride) * (img_w // stride)
    anc_ctr = jnp.stack([cx, cy, cx, cy], axis=-1).reshape(L, num_anchors * 4)
    anc_sz = jnp.stack([wa, ha, wa, ha], axis=-1).reshape(L, num_anchors * 4)
    return anc_ctr, anc_sz, anchors


def build_std_params(key, C, stride, F, NA, K):
    """Standard-layout synthetic backbone params (reg columns = [dy,dx,dh,dw] per anchor)."""
    k1, k2, k3 = jax.random.split(key, 3)
    return {
        "stem_w": jax.random.normal(k1, (C * stride * stride, F), jnp.float32) * 0.05,
        "stem_b": jnp.zeros((F,), jnp.float32),
        "reg_w": jax.random.normal(k2, (F, NA * 4), jnp.float32) * 0.05,
        "reg_b": jnp.zeros((NA * 4,), jnp.float32),
        "cls_w": jax.random.normal(k3, (F, NA * K), jnp.float32) * 0.05,
        "cls_b": jnp.full((NA * K,), -2.0, jnp.float32),
    }


def fuse_params(p, NA):
    """Build the merged head: [cls | d_ctr | d_sz] with regression columns
    permuted/duplicated so the bbox transform needs no cross-lane data movement."""
    base = jnp.arange(NA) * 4
    ctr_idx = (base[:, None] + jnp.array([1, 0, 1, 0])[None, :]).reshape(-1)  # dx,dy,dx,dy
    sz_idx = (base[:, None] + jnp.array([3, 2, 3, 2])[None, :]).reshape(-1)   # dw,dh,dw,dh
    head_w = jnp.concatenate([p["cls_w"], p["reg_w"][:, ctr_idx], p["reg_w"][:, sz_idx]], axis=1)
    head_b = jnp.concatenate([p["cls_b"], p["reg_b"][ctr_idx], p["reg_b"][sz_idx]], axis=0)
    return {
        "stem_w": p["stem_w"],
        "stem_b": p["stem_b"].reshape(1, -1),
        "head_w": head_w,
        "head_b": head_b.reshape(1, -1),
    }


# ----------------------------------------------------------------------------
# Pure-JAX reference (standard layout) for a correctness check
# ----------------------------------------------------------------------------
def reference_forward(p, anchors, x, num_classes, stride):
    B, C, H, W = x.shape
    fh, fw = H // stride, W // stride
    xp = x.reshape(B, C, fh, stride, fw, stride)
    xp = jnp.transpose(xp, (0, 2, 4, 1, 3, 5)).reshape(fh * fw, C * stride * stride)
    feat = jnp.maximum(xp @ p["stem_w"] + p["stem_b"], 0.0)
    reg = (feat @ p["reg_w"] + p["reg_b"]).reshape(-1, 4)
    cls = (feat @ p["cls_w"] + p["cls_b"]).reshape(-1, num_classes)
    y1, x1, y2, x2 = anchors[:, 0], anchors[:, 1], anchors[:, 2], anchors[:, 3]
    cy_a, cx_a = (y1 + y2) * 0.5, (x1 + x2) * 0.5
    ha, wa = y2 - y1, x2 - x1
    w = jnp.exp(reg[:, 3]) * wa
    h = jnp.exp(reg[:, 2]) * ha
    ycn = reg[:, 0] * ha + cy_a
    xcn = reg[:, 1] * wa + cx_a
    xmin = jnp.maximum(xcn - w * 0.5, 0.0)
    ymin = jnp.maximum(ycn - h * 0.5, 0.0)
    xmax = jnp.minimum(xcn + w * 0.5, float(W - 1))
    ymax = jnp.minimum(ycn + h * 0.5, float(H - 1))
    return jnp.stack([xmin, ymin, xmax, ymax], axis=-1), jax.nn.sigmoid(cls)


# ----------------------------------------------------------------------------
# Main
# ----------------------------------------------------------------------------
if __name__ == "__main__":
    key = jax.random.PRNGKey(0)
    kx, kp = jax.random.split(key)

    C, H, W = 3, 32, 32
    F = 32          # stem / feature width
    NA = 9          # anchors per location
    K = 8           # num classes
    STRIDE = 4

    std_params = build_std_params(kp, C, STRIDE, F, NA, K)
    fused_params = fuse_params(std_params, NA)
    anc_ctr, anc_sz, anchors = build_anchor_constants(H, W, STRIDE, 16.0, NA)

    x = jax.random.normal(kx, (1, C, H, W), dtype=jnp.float32)   # NCHW, like PyTorch

    fwd = jax.jit(functools.partial(efficientdet_forward,
                                    num_anchors=NA, num_classes=K, stride=STRIDE))
    boxes, scores = fwd(fused_params, anc_ctr, anc_sz, x)
    jax.block_until_ready(boxes)
    jax.block_until_ready(scores)

    A = (H // STRIDE) * (W // STRIDE) * NA
    assert boxes.shape == (A, 4)
    assert scores.shape == (A, K)

    # correctness check against a pure-JAX reference (loose tol: MXU f32 matmul precision)
    ref_boxes, ref_scores = reference_forward(std_params, anchors, x, K, STRIDE)
    assert jnp.allclose(boxes, ref_boxes, atol=5e-2, rtol=5e-2)
    assert jnp.allclose(scores, ref_scores, atol=5e-3, rtol=5e-3)

    # TODO(synk): the full EfficientNet+BiFPN backbone is replaced by a synthetic
    # patchify + 1x1-head backbone; the module's own post-processing semantics are exact.
    print("KERNEL_OK")
</pallas_src>

<mosaic_0001>
module attributes {stable_mosaic.version = 11 : i64} {
  func.func @_efficientdet_fused_kernel(%arg0: memref<64x48xf32, #tpu.memory_space<vmem>>, %arg1: memref<48x32xf32, #tpu.memory_space<vmem>>, %arg2: memref<1x32xf32, #tpu.memory_space<vmem>>, %arg3: memref<32x144xf32, #tpu.memory_space<vmem>>, %arg4: memref<1x144xf32, #tpu.memory_space<vmem>>, %arg5: memref<64x36xf32, #tpu.memory_space<vmem>>, %arg6: memref<64x36xf32, #tpu.memory_space<vmem>>, %arg7: memref<64x36xf32, #tpu.memory_space<vmem>>, %arg8: memref<64x72xf32, #tpu.memory_space<vmem>>) attributes {dimension_semantics = [], scalar_prefetch = 0 : i64, scratch_operands = 0 : i64, tpu.core_type = #tpu.core_type<tc>} {
    %c0 = arith.constant 0 : index
    %c0_0 = arith.constant 0 : index
    %0 = vector.load %arg0[%c0, %c0_0] : memref<64x48xf32, #tpu.memory_space<vmem>>, vector<64x48xf32>
    %c0_1 = arith.constant 0 : index
    %c0_2 = arith.constant 0 : index
    %1 = vector.load %arg1[%c0_1, %c0_2] : memref<48x32xf32, #tpu.memory_space<vmem>>, vector<48x32xf32>
    %cst = arith.constant dense<0.000000e+00> : vector<64x32xf32>
    %2 = tpu.matmul %0, %1, %cst {dimension_numbers = #tpu.dot_dimension_numbers<[1], [0], [0], [1], [0, 0, 1, 1], [], []>} : vector<64x48xf32>, vector<48x32xf32>, vector<64x32xf32> -> vector<64x32xf32>
    %c0_3 = arith.constant 0 : index
    %c0_4 = arith.constant 0 : index
    %3 = vector.load %arg2[%c0_3, %c0_4] : memref<1x32xf32, #tpu.memory_space<vmem>>, vector<1x32xf32>
    %4 = vector.broadcast %3 : vector<1x32xf32> to vector<64x32xf32>
    %5 = arith.addf %2, %4 : vector<64x32xf32>
    %cst_5 = arith.constant 0.000000e+00 : f32
    %6 = vector.broadcast %cst_5 : f32 to vector<64x32xf32>
    %7 = arith.maximumf %5, %6 : vector<64x32xf32>
    %c0_6 = arith.constant 0 : index
    %c0_7 = arith.constant 0 : index
    %8 = vector.load %arg3[%c0_6, %c0_7] : memref<32x144xf32, #tpu.memory_space<vmem>>, vector<32x144xf32>
    %cst_8 = arith.constant dense<0.000000e+00> : vector<64x144xf32>
    %9 = tpu.matmul %7, %8, %cst_8 {dimension_numbers = #tpu.dot_dimension_numbers<[1], [0], [0], [1], [0, 0, 1, 1], [], []>} : vector<64x32xf32>, vector<32x144xf32>, vector<64x144xf32> -> vector<64x144xf32>
    %c0_9 = arith.constant 0 : index
    %c0_10 = arith.constant 0 : index
    %10 = vector.load %arg4[%c0_9, %c0_10] : memref<1x144xf32, #tpu.memory_space<vmem>>, vector<1x144xf32>
    %11 = vector.broadcast %10 : vector<1x144xf32> to vector<64x144xf32>
    %12 = arith.addf %9, %11 : vector<64x144xf32>
    %13 = vector.extract_strided_slice %12 {offsets = [0, 0], sizes = [64, 72], strides = [1, 1]} : vector<64x144xf32> to vector<64x72xf32>
    %14 = vector.extract_strided_slice %12 {offsets = [0, 72], sizes = [64, 36], strides = [1, 1]} : vector<64x144xf32> to vector<64x36xf32>
    %15 = vector.extract_strided_slice %12 {offsets = [0, 108], sizes = [64, 36], strides = [1, 1]} : vector<64x144xf32> to vector<64x36xf32>
    %c0_11 = arith.constant 0 : index
    %c0_12 = arith.constant 0 : index
    %16 = vector.load %arg5[%c0_11, %c0_12] : memref<64x36xf32, #tpu.memory_space<vmem>>, vector<64x36xf32>
    %c0_13 = arith.constant 0 : index
    %c0_14 = arith.constant 0 : index
    %17 = vector.load %arg6[%c0_13, %c0_14] : memref<64x36xf32, #tpu.memory_space<vmem>>, vector<64x36xf32>
    %18 = arith.mulf %14, %17 : vector<64x36xf32>
    %19 = arith.addf %18, %16 : vector<64x36xf32>
    %20 = math.exp %15 : vector<64x36xf32>
    %21 = arith.mulf %20, %17 : vector<64x36xf32>
    %22 = tpu.iota {dimensions = array<i32: 1>} : vector<64x36xi32>
    %c4_i32 = arith.constant 4 : i32
    %c0_i32 = arith.constant 0 : i32
    %23 = arith.cmpi eq, %c4_i32, %c0_i32 : i32
    %c1_i32 = arith.constant 1 : i32
    %24 = arith.select %23, %c1_i32, %c4_i32 : i32
    %25 = vector.broadcast %24 : i32 to vector<64x36xi32>
    %26 = arith.remsi %22, %25 : vector<64x36xi32>
    %c0_i32_15 = arith.constant 0 : i32
    %27 = vector.broadcast %c0_i32_15 : i32 to vector<64x36xi32>
    %28 = arith.cmpi ne, %26, %27 : vector<64x36xi32>
    %c0_i32_16 = arith.constant 0 : i32
    %29 = vector.broadcast %c0_i32_16 : i32 to vector<64x36xi32>
    %30 = arith.cmpi slt, %26, %29 : vector<64x36xi32>
    %c0_i32_17 = arith.constant 0 : i32
    %31 = arith.cmpi slt, %24, %c0_i32_17 : i32
    %32 = vector.broadcast %31 : i1 to vector<64x36xi1>
    %33 = vector.broadcast %32 : vector<64x36xi1> to vector<64x36xi1>
    %34 = arith.xori %30, %33 : vector<64x36xi1>
    %35 = arith.andi %34, %28 : vector<64x36xi1>
    %36 = vector.broadcast %24 : i32 to vector<64x36xi32>
    %37 = arith.addi %26, %36 : vector<64x36xi32>
    %38 = arith.select %35, %37, %26 : vector<64x36xi1>, vector<64x36xi32>
    %c2_i32 = arith.constant 2 : i32
    %39 = vector.broadcast %c2_i32 : i32 to vector<64x36xi32>
    %40 = arith.cmpi slt, %38, %39 : vector<64x36xi32>
    %cst_18 = arith.constant -5.000000e-01 : f32
    %cst_19 = arith.constant 5.000000e-01 : f32
    %41 = vector.broadcast %cst_18 : f32 to vector<64x36xf32>
    %42 = vector.broadcast %cst_19 : f32 to vector<64x36xf32>
    %43 = arith.select %40, %41, %42 : vector<64x36xi1>, vector<64x36xf32>
    %44 = arith.mulf %43, %21 : vector<64x36xf32>
    %45 = arith.addf %19, %44 : vector<64x36xf32>
    %c2_i32_20 = arith.constant 2 : i32
    %c0_i32_21 = arith.constant 0 : i32
    %46 = arith.cmpi eq, %c2_i32_20, %c0_i32_21 : i32
    %c1_i32_22 = arith.constant 1 : i32
    %47 = arith.select %46, %c1_i32_22, %c2_i32_20 : i32
    %48 = vector.broadcast %47 : i32 to vector<64x36xi32>
    %49 = arith.remsi %22, %48 : vector<64x36xi32>
    %c0_i32_23 = arith.constant 0 : i32
    %50 = vector.broadcast %c0_i32_23 : i32 to vector<64x36xi32>
    %51 = arith.cmpi ne, %49, %50 : vector<64x36xi32>
    %c0_i32_24 = arith.constant 0 : i32
    %52 = vector.broadcast %c0_i32_24 : i32 to vector<64x36xi32>
    %53 = arith.cmpi slt, %49, %52 : vector<64x36xi32>
    %c0_i32_25 = arith.constant 0 : i32
    %54 = arith.cmpi slt, %47, %c0_i32_25 : i32
    %55 = vector.broadcast %54 : i1 to vector<64x36xi1>
    %56 = vector.broadcast %55 : vector<64x36xi1> to vector<64x36xi1>
    %57 = arith.xori %53, %56 : vector<64x36xi1>
    %58 = arith.andi %57, %51 : vector<64x36xi1>
    %59 = vector.broadcast %47 : i32 to vector<64x36xi32>
    %60 = arith.addi %49, %59 : vector<64x36xi32>
    %61 = arith.select %58, %60, %49 : vector<64x36xi1>, vector<64x36xi32>
    %c0_i32_26 = arith.constant 0 : i32
    %62 = vector.broadcast %c0_i32_26 : i32 to vector<64x36xi32>
    %63 = arith.cmpi eq, %61, %62 : vector<64x36xi32>
    %cst_27 = arith.constant 3.100000e+01 : f32
    %cst_28 = arith.constant 3.100000e+01 : f32
    %64 = vector.broadcast %cst_27 : f32 to vector<64x36xf32>
    %65 = vector.broadcast %cst_28 : f32 to vector<64x36xf32>
    %66 = arith.select %63, %64, %65 : vector<64x36xi1>, vector<64x36xf32>
    %cst_29 = arith.constant 0.000000e+00 : f32
    %67 = vector.broadcast %cst_29 : f32 to vector<64x36xf32>
    %68 = arith.maximumf %45, %67 : vector<64x36xf32>
    %69 = arith.minimumf %45, %66 : vector<64x36xf32>
    %70 = arith.select %40, %68, %69 : vector<64x36xi1>, vector<64x36xf32>
    %c0_30 = arith.constant 0 : index
    %c0_31 = arith.constant 0 : index
    %71 = vector.load %arg7[%c0_30, %c0_31] : memref<64x36xf32, #tpu.memory_space<vmem>>, vector<64x36xf32>
    tpu.vector_store %arg7[%c0_30, %c0_31], %70 {strides = array<i32>} : memref<64x36xf32, #tpu.memory_space<vmem>>, vector<64x36xf32>,
    %72 = arith.negf %13 : vector<64x72xf32>
    %73 = math.exp %72 : vector<64x72xf32>
    %cst_32 = arith.constant 1.000000e+00 : f32
    %74 = vector.broadcast %cst_32 : f32 to vector<64x72xf32>
    %75 = arith.addf %74, %73 : vector<64x72xf32>
    %76 = arith.divf %74, %75 : vector<64x72xf32>
    %c0_33 = arith.constant 0 : index
    %c0_34 = arith.constant 0 : index
    %77 = vector.load %arg8[%c0_33, %c0_34] : memref<64x72xf32, #tpu.memory_space<vmem>>, vector<64x72xf32>
    tpu.vector_store %arg8[%c0_33, %c0_34], %76 {strides = array<i32>} : memref<64x72xf32, #tpu.memory_space<vmem>>, vector<64x72xf32>,
    return
  }
}

</mosaic_0001>

<llo_original>
// kernel: efficientdet_forward.1
$region0: #{efficientdet_forward.1}
  #allocation0 [shape = 'u32[]', space=smem, size = 0x4, offset = 0x4, fixed_abs, tag = 'smem constant byte address 0x4 - core index']
  #allocation1 [shape = 'u32[144,128]{1,0:T(1,128)}', space=vmem, size = 0x12000, scoped, tag = 'internal scratch']
  %s0 = inlined_call_operand.vmem [shape: f32[64,48], index: 0, kind: input, shape index: {}]
  %s1 = inlined_call_operand.vmem [shape: f32[48,32], index: 1, kind: input, shape index: {}]
  %s2 = inlined_call_operand.vmem [shape: f32[1,32], index: 2, kind: input, shape index: {}]
  %s3 = inlined_call_operand.vmem [shape: f32[32,144], index: 3, kind: input, shape index: {}]
  %s4 = inlined_call_operand.vmem [shape: f32[1,144], index: 4, kind: input, shape index: {}]
  %s5 = inlined_call_operand.vmem [shape: f32[64,36], index: 5, kind: input, shape index: {}]
  %s6 = inlined_call_operand.vmem [shape: f32[64,36], index: 6, kind: input, shape index: {}]
  %s7 = inlined_call_operand.vmem [shape: f32[64,36], index: 7, kind: output, shape index: {0}]
  %s8 = inlined_call_operand.vmem [shape: f32[64,72], index: 8, kind: output, shape index: {1}]
  %9 = xla_tuple %s7, %s8
  %s10 = sld [smem:[#allocation0]]
  $region46: #{efficientdet_forward.1} parent=0
    _
  %s12 = ssub.s32 1, %s10
  %s13 = scalar_select 0, %s12, %s10
  // Predicated region
  $region2: #{efficientdet_forward.1} parent=0 // pred_check
    _
  $region3: #{efficientdet_forward.1} parent=0 // pred_check_branch
    %15 = sbr.rel (0) target = $region5
  $region4: #{efficientdet_forward.1} parent=0 // pred_region
    _
  $region5: #{efficientdet_forward.1} parent=0 // pred_fallthru
    _
  // Predicated region
  $region6: #{efficientdet_forward.1} parent=0 // pred_check
    _
  $region7: #{efficientdet_forward.1} parent=0 // pred_check_branch
    %17 = sbr.rel (0) target = $region9
  $region8: #{efficientdet_forward.1} parent=0 // pred_region
    _
  $region9: #{efficientdet_forward.1} parent=0 // pred_fallthru
    _
  // Predicated region
  $region10: #{efficientdet_forward.1} parent=0 // pred_check
    _
  $region11: #{efficientdet_forward.1} parent=0 // pred_check_branch
    %19 = sbr.rel (0) target = $region13
  $region12: #{efficientdet_forward.1} parent=0 // pred_region
    _
  $region13: #{efficientdet_forward.1} parent=0 // pred_fallthru
    _
  // Predicated region
  $region14: #{efficientdet_forward.1} parent=0 // pred_check
    _
  $region15: #{efficientdet_forward.1} parent=0 // pred_check_branch
    %21 = sbr.rel (0) target = $region17
  $region16: #{efficientdet_forward.1} parent=0 // pred_region
    _
  $region17: #{efficientdet_forward.1} parent=0 // pred_fallthru
    _
  // Predicated region
  $region18: #{efficientdet_forward.1} parent=0 // pred_check
    _
  $region19: #{efficientdet_forward.1} parent=0 // pred_check_branch
    %23 = sbr.rel (0) target = $region21
  $region20: #{efficientdet_forward.1} parent=0 // pred_region
    _
  $region21: #{efficientdet_forward.1} parent=0 // pred_fallthru
    _
  // Predicated region
  $region22: #{efficientdet_forward.1} parent=0 // pred_check
    _
  $region23: #{efficientdet_forward.1} parent=0 // pred_check_branch
    %25 = sbr.rel (0) target = $region25
  $region24: #{efficientdet_forward.1} parent=0 // pred_region
    _
  $region25: #{efficientdet_forward.1} parent=0 // pred_fallthru
    _
  // Predicated region
  $region26: #{efficientdet_forward.1} parent=0 // pred_check
    _
  $region27: #{efficientdet_forward.1} parent=0 // pred_check_branch
    %27 = sbr.rel (0) target = $region29
  $region28: #{efficientdet_forward.1} parent=0 // pred_region
    _
  $region29: #{efficientdet_forward.1} parent=0 // pred_fallthru
    _
  %v28 = vld [vmem:[%s0] sm:$0xff]
  %v29 = vld [vmem:[%s0 + $0x8] sm:$0xff]
  %v30 = vld [vmem:[%s0 + $0x10] sm:$0xff]
  %v31 = vld [vmem:[%s0 + $0x18] sm:$0xff]
  %v32 = vld [vmem:[%s0 + $0x20] sm:$0xff]
  %v33 = vld [vmem:[%s0 + $0x28] sm:$0xff]
  %v34 = vld [vmem:[%s0 + $0x30] sm:$0xff]
  %v35 = vld [vmem:[%s0 + $0x38] sm:$0xff]
  %v36 = vld [vmem:[%s1] sm:$0xff]
  %v37 = vld [vmem:[%s1 + $0x8] sm:$0xff]
  %v38 = vld [vmem:[%s1 + $0x10] sm:$0xff]
  %v39 = vld [vmem:[%s1 + $0x18] sm:$0xff]
  %v40 = vld [vmem:[%s1 + $0x20] sm:$0xff]
  %v41 = vld [vmem:[%s1 + $0x28] sm:$0xff]
  %v42 = vld [vmem:[%s2] sm:$0x1]
  %v44 = vlaneseq
  %v45 = vshrl.u32 %v44, 7
  %v46 = vsub.s32 0, %v45
  %v47 = vrot.slane %v42, %v46
  %vm49 = vcmask 392192
  %v51 = vsel %vm49, %v28, 0
  %v54 = vsel %vm49, %v29, 0
  %v57 = vsel %vm49, %v30, 0
  %v60 = vsel %vm49, %v31, 0
  %v63 = vsel %vm49, %v32, 0
  %v66 = vsel %vm49, %v33, 0
  %v69 = vsel %vm49, %v34, 0
  %v72 = vsel %vm49, %v35, 0
  %74 = vmatprep.subr.mxu0 0.0
  %75 = vmatpush1.msra.mxu0 %v36
  %76 = vmatprep.subr.mxu0 0.0
  %77 = vmatpush1.msra.mxu0 %v37
  %78 = vmatprep.subr.mxu0 0.0
  %79 = vmatpush1.msra.mxu0 %v38
  %80 = vmatprep.subr.mxu0 0.0
  %81 = vmatpush1.msra.mxu0 %v39
  %82 = vmatprep.subr.mxu0 0.0
  %83 = vmatpush1.msra.mxu0 %v40
  %84 = vmatprep.subr.mxu0 0.0
  %85 = vmatpush1.msra.mxu0 %v41
  %86 = vmatprep.subr.mxu0 0.0
  %87 = vmatpush1.msra.mxu0 0.0
  %88 = vmatprep.subr.mxu0 0.0
  %89 = vmatpush1.msra.mxu0 0.0
  %90 = vmatprep.subr.mxu0 0.0
  %91 = vmatpush1.msra.mxu0 0.0
  %92 = vmatprep.subr.mxu0 0.0
  %93 = vmatpush1.msra.mxu0 0.0
  %94 = vmatprep.subr.mxu0 0.0
  %95 = vmatpush1.msra.mxu0 0.0
  %96 = vmatprep.subr.mxu0 0.0
  %97 = vmatpush1.msra.mxu0 0.0
  %98 = vmatprep.subr.mxu0 0.0
  %99 = vmatpush1.msra.mxu0 0.0
  %100 = vmatprep.subr.mxu0 0.0
  %101 = vmatpush1.msra.mxu0 0.0
  %102 = vmatprep.subr.mxu0 0.0
  %103 = vmatpush1.msra.mxu0 0.0
  %104 = vmatprep.subr.mxu0 0.0
  %105 = vmatpush1.msra.mxu0 0.0
  %106 = vmatprep.subr.mxu0 0.0
  %107 = vmatpush1.msra.mxu0 0.0
  %108 = vmatprep.subr.mxu0 0.0
  %109 = vmatpush1.msra.mxu0 0.0
  %110 = vmatprep.subr.mxu0 0.0
  %111 = vmatpush1.msra.mxu0 0.0
  %112 = vmatprep.subr.mxu0 0.0
  %113 = vmatpush1.msra.mxu0 0.0
  %114 = vmatprep.subr.mxu0 0.0
  %115 = vmatpush1.msra.mxu0 0.0
  %116 = vmatprep.subr.mxu0 0.0
  %117 = vmatpush1.msra.mxu0 0.0
  %118 = vmatprep.subr.mxu0 0.0
  %119 = vmatpush1.msra.mxu0 0.0
  %120 = vmatprep.subr.mxu0 0.0
  %121 = vmatpush1.msra.mxu0 0.0
  %122 = vmatprep.subr.mxu0 0.0
  %123 = vmatpush1.msra.mxu0 0.0
  %124 = vmatprep.subr.mxu0 0.0
  %125 = vmatpush1.msra.mxu0 0.0
  %126 = vmatprep.subr.mxu0 0.0
  %127 = vmatpush1.msra.mxu0 0.0
  %128 = vmatprep.subr.mxu0 0.0
  %129 = vmatpush1.msra.mxu0 0.0
  %130 = vmatprep.subr.mxu0 0.0
  %131 = vmatpush1.msra.mxu0 0.0
  %132 = vmatprep.subr.mxu0 0.0
  %133 = vmatpush1.msra.mxu0 0.0
  %134 = vmatprep.subr.mxu0 0.0
  %135 = vmatpush1.msra.mxu0 0.0
  %136 = vmatprep.subr.mxu0 0.0
  %137 = vmatpush1.msra.mxu0 0.0
  %138 = vmatprep.mubr.f32.mxu0 0.0
  %139 = vmatmul.mubr.f32.gmra.mrb[0].mxu0 %v51
  %v140 = vpop.f32.mrb[0].mxu0
  %v141 = vadd.f32 %v47, %v140
  %v142 = vpop.f32.mrb[0].mxu0
  %143 = vmatprep.mubr.f32.mxu0 0.0
  %144 = vmatmul.mubr.f32.gmra.mrb[0].mxu0 %v54
  %v145 = vpop.f32.mrb[0].mxu0
  %v146 = vadd.f32 %v47, %v145
  %v147 = vpop.f32.mrb[0].mxu0
  %148 = vmatprep.mubr.f32.mxu0 0.0
  %149 = vmatmul.mubr.f32.gmra.mrb[0].mxu0 %v57
  %v150 = vpop.f32.mrb[0].mxu0
  %v151 = vadd.f32 %v47, %v150
  %v152 = vpop.f32.mrb[0].mxu0
  %153 = vmatprep.mubr.f32.mxu0 0.0
  %154 = vmatmul.mubr.f32.gmra.mrb[0].mxu0 %v60
  %v155 = vpop.f32.mrb[0].mxu0
  %v156 = vadd.f32 %v47, %v155
  %v157 = vpop.f32.mrb[0].mxu0
  %158 = vmatprep.mubr.f32.mxu0 0.0
  %159 = vmatmul.mubr.f32.gmra.mrb[0].mxu0 %v63
  %v160 = vpop.f32.mrb[0].mxu0
  %v161 = vadd.f32 %v47, %v160
  %v162 = vpop.f32.mrb[0].mxu0
  %163 = vmatprep.mubr.f32.mxu0 0.0
  %164 = vmatmul.mubr.f32.gmra.mrb[0].mxu0 %v66
  %v165 = vpop.f32.mrb[0].mxu0
  %v166 = vadd.f32 %v47, %v165
  %v167 = vpop.f32.mrb[0].mxu0
  %168 = vmatprep.mubr.f32.mxu0 0.0
  %169 = vmatmul.mubr.f32.gmra.mrb[0].mxu0 %v69
  %v170 = vpop.f32.mrb[0].mxu0
  %v171 = vadd.f32 %v47, %v170
  %v172 = vpop.f32.mrb[0].mxu0
  %173 = vmatprep.mubr.f32.mxu0 0.0
  %174 = vmatmul.mubr.f32.gmra.mrb[0].mxu0 %v72
  %v175 = vpop.f32.mrb[0].mxu0
  %v176 = vadd.f32 %v47, %v175
  %v177 = vpop.f32.mrb[0].mxu0
  %178 = vdwg.mxu0
  %v179 = vmax.f32 %v141, 0.0
  %v180 = vmax.f32 %v146, 0.0
  %v181 = vmax.f32 %v151, 0.0
  %v182 = vmax.f32 %v156, 0.0
  %v183 = vmax.f32 %v161, 0.0
  %v184 = vmax.f32 %v166, 0.0
  %v185 = vmax.f32 %v171, 0.0
  %v186 = vmax.f32 %v176, 0.0
  %v187 = vld [vmem:[%s3] sm:$0xff]
  %v188 = vld [vmem:[%s3 + $0x8] sm:$0xff]
  %v189 = vld [vmem:[%s3 + $0x10] sm:$0xff]
  %v190 = vld [vmem:[%s3 + $0x18] sm:$0xff]
  %v191 = vld [vmem:[%s3 + $0x20] sm:$0xff]
  %v192 = vld [vmem:[%s3 + $0x28] sm:$0xff]
  %v193 = vld [vmem:[%s3 + $0x30] sm:$0xff]
  %v194 = vld [vmem:[%s3 + $0x38] sm:$0xff]
  %v195 = vld [vmem:[%s4] sm:$0x3]
  %v197 = vlaneseq
  %v198 = vshrl.u32 %v197, 7
  %v199 = vsub.s32 0, %v198
  %v200 = vrot.slane %v195, %v199
  %v201 = vlaneseq
  %v202 = vshrl.u32 %v201, 7
  %v203 = vsub.s32 1, %v202
  %v204 = vrot.slane %v195, %v203
  %vm207 = vcmask 261120
  %v209 = vsel %vm207, %v179, 0
  %v212 = vsel %vm207, %v180, 0
  %v215 = vsel %vm207, %v181, 0
  %v218 = vsel %vm207, %v182, 0
  %v221 = vsel %vm207, %v183, 0
  %v224 = vsel %vm207, %v184, 0
  %v227 = vsel %vm207, %v185, 0
  %v230 = vsel %vm207, %v186, 0
  %232 = vmatprep.subr.mxu0 %v188
  %233 = vmatpush1.msra.mxu0 %v187
  %234 = vmatprep.subr.mxu0 %v190
  %235 = vmatpush1.msra.mxu0 %v189
  %236 = vmatprep.subr.mxu0 %v192
  %237 = vmatpush1.msra.mxu0 %v191
  %238 = vmatprep.subr.mxu0 %v194
  %239 = vmatpush1.msra.mxu0 %v193
  %240 = vmatprep.subr.mxu0 0.0
  %241 = vmatpush1.msra.mxu0 0.0
  %242 = vmatprep.subr.mxu0 0.0
  %243 = vmatpush1.msra.mxu0 0.0
  %244 = vmatprep.subr.mxu0 0.0
  %245 = vmatpush1.msra.mxu0 0.0
  %246 = vmatprep.subr.mxu0 0.0
  %247 = vmatpush1.msra.mxu0 0.0
  %248 = vmatprep.subr.mxu0 0.0
  %249 = vmatpush1.msra.mxu0 0.0
  %250 = vmatprep.subr.mxu0 0.0
  %251 = vmatpush1.msra.mxu0 0.0
  %252 = vmatprep.subr.mxu0 0.0
  %253 = vmatpush1.msra.mxu0 0.0
  %254 = vmatprep.subr.mxu0 0.0
  %255 = vmatpush1.msra.mxu0 0.0
  %256 = vmatprep.subr.mxu0 0.0
  %257 = vmatpush1.msra.mxu0 0.0
  %258 = vmatprep.subr.mxu0 0.0
  %259 = vmatpush1.msra.mxu0 0.0
  %260 = vmatprep.subr.mxu0 0.0
  %261 = vmatpush1.msra.mxu0 0.0
  %262 = vmatprep.subr.mxu0 0.0
  %263 = vmatpush1.msra.mxu0 0.0
  %264 = vmatprep.subr.mxu0 0.0
  %265 = vmatpush1.msra.mxu0 0.0
  %266 = vmatprep.subr.mxu0 0.0
  %267 = vmatpush1.msra.mxu0 0.0
  %268 = vmatprep.subr.mxu0 0.0
  %269 = vmatpush1.msra.mxu0 0.0
  %270 = vmatprep.subr.mxu0 0.0
  %271 = vmatpush1.msra.mxu0 0.0
  %272 = vmatprep.subr.mxu0 0.0
  %273 = vmatpush1.msra.mxu0 0.0
  %274 = vmatprep.subr.mxu0 0.0
  %275 = vmatpush1.msra.mxu0 0.0
  %276 = vmatprep.subr.mxu0 0.0
  %277 = vmatpush1.msra.mxu0 0.0
  %278 = vmatprep.subr.mxu0 0.0
  %279 = vmatpush1.msra.mxu0 0.0
  %280 = vmatprep.subr.mxu0 0.0
  %281 = vmatpush1.msra.mxu0 0.0
  %282 = vmatprep.subr.mxu0 0.0
  %283 = vmatpush1.msra.mxu0 0.0
  %284 = vmatprep.subr.mxu0 0.0
  %285 = vmatpush1.msra.mxu0 0.0
  %286 = vmatprep.subr.mxu0 0.0
  %287 = vmatpush1.msra.mxu0 0.0
  %288 = vmatprep.subr.mxu0 0.0
  %289 = vmatpush1.msra.mxu0 0.0
  %290 = vmatprep.subr.mxu0 0.0
  %291 = vmatpush1.msra.mxu0 0.0
  %292 = vmatprep.subr.mxu0 0.0
  %293 = vmatpush1.msra.mxu0 0.0
  %294 = vmatprep.subr.mxu0 0.0
  %295 = vmatpush1.msra.mxu0 0.0
  %296 = vmatprep.mubr.f32.mxu0 0.0
  %297 = vmatmul.mubr.f32.gmra.mrb[0].mxu0 %v209
  %v298 = vpop.f32.mrb[0].mxu0
  %v299 = vadd.f32 %v200, %v298
  %v300 = vpop.f32.mrb[0].mxu0
  %v301 = vadd.f32 %v204, %v300
  %302 = vmatprep.mubr.f32.mxu0 0.0
  %303 = vmatmul.mubr.f32.gmra.mrb[0].mxu0 %v212
  %v304 = vpop.f32.mrb[0].mxu0
  %v305 = vadd.f32 %v200, %v304
  %v306 = vpop.f32.mrb[0].mxu0
  %v307 = vadd.f32 %v204, %v306
  %308 = vmatprep.mubr.f32.mxu0 0.0
  %309 = vmatmul.mubr.f32.gmra.mrb[0].mxu0 %v215
  %v310 = vpop.f32.mrb[0].mxu0
  %v311 = vadd.f32 %v200, %v310
  %v312 = vpop.f32.mrb[0].mxu0
  %v313 = vadd.f32 %v204, %v312
  %314 = vmatprep.mubr.f32.mxu0 0.0
  %315 = vmatmul.mubr.f32.gmra.mrb[0].mxu0 %v218
  %v316 = vpop.f32.mrb[0].mxu0
  %v317 = vadd.f32 %v200, %v316
  %v318 = vpop.f32.mrb[0].mxu0
  %v319 = vadd.f32 %v204, %v318
  %320 = vmatprep.mubr.f32.mxu0 0.0
  %321 = vmatmul.mubr.f32.gmra.mrb[0].mxu0 %v221
  %v322 = vpop.f32.mrb[0].mxu0
  %v323 = vadd.f32 %v200, %v322
  %v324 = vpop.f32.mrb[0].mxu0
  %v325 = vadd.f32 %v204, %v324
  %326 = vmatprep.mubr.f32.mxu0 0.0
  %327 = vmatmul.mubr.f32.gmra.mrb[0].mxu0 %v224
  %v328 = vpop.f32.mrb[0].mxu0
  %v329 = vadd.f32 %v200, %v328
  %v330 = vpop.f32.mrb[0].mxu0
  %v331 = vadd.f32 %v204, %v330
  %332 = vmatprep.mubr.f32.mxu0 0.0
  %333 = vmatmul.mubr.f32.gmra.mrb[0].mxu0 %v227
  %v334 = vpop.f32.mrb[0].mxu0
  %v335 = vadd.f32 %v200, %v334
  %v336 = vpop.f32.mrb[0].mxu0
  %v337 = vadd.f32 %v204, %v336
  %338 = vmatprep.mubr.f32.mxu0 0.0
  %339 = vmatmul.mubr.f32.gmra.mrb[0].mxu0 %v230
  %v340 = vpop.f32.mrb[0].mxu0
  %v341 = vadd.f32 %v200, %v340
  %v342 = vpop.f32.mrb[0].mxu0
  %v343 = vadd.f32 %v204, %v342
  %344 = vdwg.mxu0
  %v345 = vld [vmem:[%s5] sm:$0xff]
  %v346 = vld [vmem:[%s5 + $0x8] sm:$0xff]
  %v347 = vld [vmem:[%s5 + $0x10] sm:$0xff]
  %v348 = vld [vmem:[%s5 + $0x18] sm:$0xff]
  %v349 = vld [vmem:[%s5 + $0x20] sm:$0xff]
  %v350 = vld [vmem:[%s5 + $0x28] sm:$0xff]
  %v351 = vld [vmem:[%s5 + $0x30] sm:$0xff]
  %v352 = vld [vmem:[%s5 + $0x38] sm:$0xff]
  %v353 = vld [vmem:[%s6] sm:$0xff]
  %v354 = vld [vmem:[%s6 + $0x8] sm:$0xff]
  %v355 = vld [vmem:[%s6 + $0x10] sm:$0xff]
  %v356 = vld [vmem:[%s6 + $0x18] sm:$0xff]
  %v357 = vld [vmem:[%s6 + $0x20] sm:$0xff]
  %v358 = vld [vmem:[%s6 + $0x28] sm:$0xff]
  %v359 = vld [vmem:[%s6 + $0x30] sm:$0xff]
  %v360 = vld [vmem:[%s6 + $0x38] sm:$0xff]
  %369 = vrot.lane.b32.xlu0 %v353, 72
  %v370 = vpop.permute.xlu0 %369
  %371 = vrot.lane.b32.xlu0 %v354, 72
  %v372 = vpop.permute.xlu0 %371
  %373 = vrot.lane.b32.xlu0 %v355, 72
  %v374 = vpop.permute.xlu0 %373
  %375 = vrot.lane.b32.xlu0 %v356, 72
  %v376 = vpop.permute.xlu0 %375
  %377 = vrot.lane.b32.xlu0 %v357, 72
  %v378 = vpop.permute.xlu0 %377
  %379 = vrot.lane.b32.xlu0 %v358, 72
  %v380 = vpop.permute.xlu0 %379
  %381 = vrot.lane.b32.xlu0 %v359, 72
  %v382 = vpop.permute.xlu0 %381
  %383 = vrot.lane.b32.xlu0 %v360, 72
  %v384 = vpop.permute.xlu0 %383
  %v393 = vmul.f32 %v299, %v370
  %v394 = vmul.f32 %v305, %v372
  %v395 = vmul.f32 %v311, %v374
  %v396 = vmul.f32 %v317, %v376
  %v397 = vmul.f32 %v323, %v378
  %v398 = vmul.f32 %v329, %v380
  %v399 = vmul.f32 %v335, %v382
  %v400 = vmul.f32 %v341, %v384
  %409 = vrot.lane.b32.xlu0 %v345, 72
  %v410 = vpop.permute.xlu0 %409
  %411 = vrot.lane.b32.xlu0 %v346, 72
  %v412 = vpop.permute.xlu0 %411
  %413 = vrot.lane.b32.xlu0 %v347, 72
  %v414 = vpop.permute.xlu0 %413
  %415 = vrot.lane.b32.xlu0 %v348, 72
  %v416 = vpop.permute.xlu0 %415
  %417 = vrot.lane.b32.xlu0 %v349, 72
  %v418 = vpop.permute.xlu0 %417
  %419 = vrot.lane.b32.xlu0 %v350, 72
  %v420 = vpop.permute.xlu0 %419
  %421 = vrot.lane.b32.xlu0 %v351, 72
  %v422 = vpop.permute.xlu0 %421
  %423 = vrot.lane.b32.xlu0 %v352, 72
  %v424 = vpop.permute.xlu0 %423
  %v433 = vadd.f32 %v393, %v410
  %v434 = vadd.f32 %v394, %v412
  %v435 = vadd.f32 %v395, %v414
  %v436 = vadd.f32 %v396, %v416
  %v437 = vadd.f32 %v397, %v418
  %v438 = vadd.f32 %v398, %v420
  %v439 = vadd.f32 %v399, %v422
  %v440 = vadd.f32 %v400, %v424
  %v441 = vmul.f32 %v299, 1.442695
  %v442 = vpow.pop %v441
  %v443 = vmul.f32 %v301, 1.442695
  %v444 = vpow.pop %v443
  %v445 = vmul.f32 %v305, 1.442695
  %v446 = vpow.pop %v445
  %v447 = vmul.f32 %v307, 1.442695
  %v448 = vpow.pop %v447
  %v449 = vmul.f32 %v311, 1.442695
  %v450 = vpow.pop %v449
  %v451 = vmul.f32 %v313, 1.442695
  %v452 = vpow.pop %v451
  %v453 = vmul.f32 %v317, 1.442695
  %v454 = vpow.pop %v453
  %v455 = vmul.f32 %v319, 1.442695
  %v456 = vpow.pop %v455
  %v457 = vmul.f32 %v323, 1.442695
  %v458 = vpow.pop %v457
  %v459 = vmul.f32 %v325, 1.442695
  %v460 = vpow.pop %v459
  %v461 = vmul.f32 %v329, 1.442695
  %v462 = vpow.pop %v461
  %v463 = vmul.f32 %v331, 1.442695
  %v464 = vpow.pop %v463
  %v465 = vmul.f32 %v335, 1.442695
  %v466 = vpow.pop %v465
  %v467 = vmul.f32 %v337, 1.442695
  %v468 = vpow.pop %v467
  %v469 = vmul.f32 %v341, 1.442695
  %v470 = vpow.pop %v469
  %v471 = vmul.f32 %v343, 1.442695
  %v472 = vpow.pop %v471
  %473 = vrot.lane.b32.xlu0 %v353, 108
  %v474 = vpop.permute.xlu0 %473
  %475 = vrot.lane.b32.xlu0 %v354, 108
  %v476 = vpop.permute.xlu0 %475
  %477 = vrot.lane.b32.xlu0 %v355, 108
  %v478 = vpop.permute.xlu0 %477
  %479 = vrot.lane.b32.xlu0 %v356, 108
  %v480 = vpop.permute.xlu0 %479
  %481 = vrot.lane.b32.xlu0 %v357, 108
  %v482 = vpop.permute.xlu0 %481
  %483 = vrot.lane.b32.xlu0 %v358, 108
  %v484 = vpop.permute.xlu0 %483
  %485 = vrot.lane.b32.xlu0 %v359, 108
  %v486 = vpop.permute.xlu0 %485
  %487 = vrot.lane.b32.xlu0 %v360, 108
  %v488 = vpop.permute.xlu0 %487
  %v497 = vmul.f32 %v442, %v474
  %v498 = vmul.f32 %v444, %v474
  %v499 = vmul.f32 %v446, %v476
  %v500 = vmul.f32 %v448, %v476
  %v501 = vmul.f32 %v450, %v478
  %v502 = vmul.f32 %v452, %v478
  %v503 = vmul.f32 %v454, %v480
  %v504 = vmul.f32 %v456, %v480
  %v505 = vmul.f32 %v458, %v482
  %v506 = vmul.f32 %v460, %v482
  %v507 = vmul.f32 %v462, %v484
  %v508 = vmul.f32 %v464, %v484
  %v509 = vmul.f32 %v466, %v486
  %v510 = vmul.f32 %v468, %v486
  %v511 = vmul.f32 %v470, %v488
  %v512 = vmul.f32 %v472, %v488
  %v513 = vlaneseq
  %v514 = vand.u32 %v513, 127
  %vm515 = vcmp.lt.s32.totalorder %v514, 0
  %v516 = vsub.s32 0, %v514
  %v517 = vsel %vm515, %v516, %v514
  %v518 = vshrl.u32 %v517, 2
  %v519 = vand.u32 %v517, 3
  %v520 = vsub.s32 0, %v519
  %v521 = vsel %vm515, %v520, %v519
  %vm522 = vcmp.ne.s32.totalorder %v521, 0
  %vm523 = vcmp.lt.s32.totalorder %v521, 0
  %vm524 = vmand %vm523, %vm522
  %v525 = vadd.s32 %v521, 4
  %v526 = vsel %vm524, %v525, %v521
  %vm527 = vcmp.lt.s32.totalorder %v526, 2
  %v528 = vsel %vm527, -0.5, 0.5
  %545 = vrot.lane.b32.xlu0 %v497, 20
  %v546 = vpop.permute.xlu0 %545
  %547 = vrot.lane.b32.xlu0 %v498, 20
  %v548 = vpop.permute.xlu0 %547
  %549 = vrot.lane.b32.xlu0 %v499, 20
  %v550 = vpop.permute.xlu0 %549
  %551 = vrot.lane.b32.xlu0 %v500, 20
  %v552 = vpop.permute.xlu0 %551
  %553 = vrot.lane.b32.xlu0 %v501, 20
  %v554 = vpop.permute.xlu0 %553
  %555 = vrot.lane.b32.xlu0 %v502, 20
  %v556 = vpop.permute.xlu0 %555
  %557 = vrot.lane.b32.xlu0 %v503, 20
  %v558 = vpop.permute.xlu0 %557
  %559 = vrot.lane.b32.xlu0 %v504, 20
  %v560 = vpop.permute.xlu0 %559
  %561 = vrot.lane.b32.xlu0 %v505, 20
  %v562 = vpop.permute.xlu0 %561
  %563 = vrot.lane.b32.xlu0 %v506, 20
  %v564 = vpop.permute.xlu0 %563
  %565 = vrot.lane.b32.xlu0 %v507, 20
  %v566 = vpop.permute.xlu0 %565
  %567 = vrot.lane.b32.xlu0 %v508, 20
  %v568 = vpop.permute.xlu0 %567
  %569 = vrot.lane.b32.xlu0 %v509, 20
  %v570 = vpop.permute.xlu0 %569
  %571 = vrot.lane.b32.xlu0 %v510, 20
  %v572 = vpop.permute.xlu0 %571
  %573 = vrot.lane.b32.xlu0 %v511, 20
  %v574 = vpop.permute.xlu0 %573
  %575 = vrot.lane.b32.xlu0 %v512, 20
  %v576 = vpop.permute.xlu0 %575
  %vm577 = vcmask 162816
  %v578 = vsel %vm577, %v546, %v548
  %v579 = vsel %vm577, %v550, %v552
  %v580 = vsel %vm577, %v554, %v556
  %v581 = vsel %vm577, %v558, %v560
  %v582 = vsel %vm577, %v562, %v564
  %v583 = vsel %vm577, %v566, %v568
  %v584 = vsel %vm577, %v570, %v572
  %v585 = vsel %vm577, %v574, %v576
  %v594 = vmul.f32 %v528, %v578
  %v595 = vmul.f32 %v528, %v579
  %v596 = vmul.f32 %v528, %v580
  %v597 = vmul.f32 %v528, %v581
  %v598 = vmul.f32 %v528, %v582
  %v599 = vmul.f32 %v528, %v583
  %v600 = vmul.f32 %v528, %v584
  %v601 = vmul.f32 %v528, %v585
  %610 = vrot.lane.b32.xlu0 %v594, 72
  %v611 = vpop.permute.xlu0 %610
  %612 = vrot.lane.b32.xlu0 %v595, 72
  %v613 = vpop.permute.xlu0 %612
  %614 = vrot.lane.b32.xlu0 %v596, 72
  %v615 = vpop.permute.xlu0 %614
  %616 = vrot.lane.b32.xlu0 %v597, 72
  %v617 = vpop.permute.xlu0 %616
  %618 = vrot.lane.b32.xlu0 %v598, 72
  %v619 = vpop.permute.xlu0 %618
  %620 = vrot.lane.b32.xlu0 %v599, 72
  %v621 = vpop.permute.xlu0 %620
  %622 = vrot.lane.b32.xlu0 %v600, 72
  %v623 = vpop.permute.xlu0 %622
  %624 = vrot.lane.b32.xlu0 %v601, 72
  %v625 = vpop.permute.xlu0 %624
  %v634 = vadd.f32 %v433, %v611
  %v635 = vadd.f32 %v434, %v613
  %v636 = vadd.f32 %v435, %v615
  %v637 = vadd.f32 %v436, %v617
  %v638 = vadd.f32 %v437, %v619
  %v639 = vadd.f32 %v438, %v621
  %v640 = vadd.f32 %v439, %v623
  %v641 = vadd.f32 %v440, %v625
  %v642 = vmax.f32 %v634, 0.0
  %v643 = vmax.f32 %v635, 0.0
  %v644 = vmax.f32 %v636, 0.0
  %v645 = vmax.f32 %v637, 0.0
  %v646 = vmax.f32 %v638, 0.0
  %v647 = vmax.f32 %v639, 0.0
  %v648 = vmax.f32 %v640, 0.0
  %v649 = vmax.f32 %v641, 0.0
  %v650 = vmin.f32 %v634, 31.0
  %v651 = vmin.f32 %v635, 31.0
  %v652 = vmin.f32 %v636, 31.0
  %v653 = vmin.f32 %v637, 31.0
  %v654 = vmin.f32 %v638, 31.0
  %v655 = vmin.f32 %v639, 31.0
  %v656 = vmin.f32 %v640, 31.0
  %v657 = vmin.f32 %v641, 31.0
  %666 = vrot.lane.b32.xlu0 %v642, 56
  %v667 = vpop.permute.xlu0 %666
  %668 = vrot.lane.b32.xlu0 %v643, 56
  %v669 = vpop.permute.xlu0 %668
  %670 = vrot.lane.b32.xlu0 %v644, 56
  %v671 = vpop.permute.xlu0 %670
  %672 = vrot.lane.b32.xlu0 %v645, 56
  %v673 = vpop.permute.xlu0 %672
  %674 = vrot.lane.b32.xlu0 %v646, 56
  %v675 = vpop.permute.xlu0 %674
  %676 = vrot.lane.b32.xlu0 %v647, 56
  %v677 = vpop.permute.xlu0 %676
  %678 = vrot.lane.b32.xlu0 %v648, 56
  %v679 = vpop.permute.xlu0 %678
  %680 = vrot.lane.b32.xlu0 %v649, 56
  %v681 = vpop.permute.xlu0 %680
  %698 = vrot.lane.b32.xlu0 %v650, 56
  %v699 = vpop.permute.xlu0 %698
  %700 = vrot.lane.b32.xlu0 %v651, 56
  %v701 = vpop.permute.xlu0 %700
  %702 = vrot.lane.b32.xlu0 %v652, 56
  %v703 = vpop.permute.xlu0 %702
  %704 = vrot.lane.b32.xlu0 %v653, 56
  %v705 = vpop.permute.xlu0 %704
  %706 = vrot.lane.b32.xlu0 %v654, 56
  %v707 = vpop.permute.xlu0 %706
  %708 = vrot.lane.b32.xlu0 %v655, 56
  %v709 = vpop.permute.xlu0 %708
  %710 = vrot.lane.b32.xlu0 %v656, 56
  %v711 = vpop.permute.xlu0 %710
  %712 = vrot.lane.b32.xlu0 %v657, 56
  %v713 = vpop.permute.xlu0 %712
  %v722 = vsel %vm527, %v667, %v699
  %v723 = vsel %vm527, %v669, %v701
  %v724 = vsel %vm527, %v671, %v703
  %v725 = vsel %vm527, %v673, %v705
  %v726 = vsel %vm527, %v675, %v707
  %v727 = vsel %vm527, %v677, %v709
  %v728 = vsel %vm527, %v679, %v711
  %v729 = vsel %vm527, %v681, %v713
  %vm730 = vcmask 293888
  %731 = vst.msk [vmem:[%s7] sm:$0xff] %vm730, %v722
  %732 = vst.msk [vmem:[%s7 + $0x8] sm:$0xff] %vm730, %v723
  %733 = vst.msk [vmem:[%s7 + $0x10] sm:$0xff] %vm730, %v724
  %734 = vst.msk [vmem:[%s7 + $0x18] sm:$0xff] %vm730, %v725
  %735 = vst.msk [vmem:[%s7 + $0x20] sm:$0xff] %vm730, %v726
  %736 = vst.msk [vmem:[%s7 + $0x28] sm:$0xff] %vm730, %v727
  %737 = vst.msk [vmem:[%s7 + $0x30] sm:$0xff] %vm730, %v728
  %738 = vst.msk [vmem:[%s7 + $0x38] sm:$0xff] %vm730, %v729
  %v739 = vxor.u32 %v299, 2147483648
  %v740 = vxor.u32 %v305, 2147483648
  %v741 = vxor.u32 %v311, 2147483648
  %v742 = vxor.u32 %v317, 2147483648
  %v743 = vxor.u32 %v323, 2147483648
  %v744 = vxor.u32 %v329, 2147483648
  %v745 = vxor.u32 %v335, 2147483648
  %v746 = vxor.u32 %v341, 2147483648
  %v747 = vmul.f32 %v739, 1.442695
  %v748 = vpow.pop %v747
  %v749 = vmul.f32 %v740, 1.442695
  %v750 = vpow.pop %v749
  %v751 = vmul.f32 %v741, 1.442695
  %v752 = vpow.pop %v751
  %v753 = vmul.f32 %v742, 1.442695
  %v754 = vpow.pop %v753
  %v755 = vmul.f32 %v743, 1.442695
  %v756 = vpow.pop %v755
  %v757 = vmul.f32 %v744, 1.442695
  %v758 = vpow.pop %v757
  %v759 = vmul.f32 %v745, 1.442695
  %v760 = vpow.pop %v759
  %v761 = vmul.f32 %v746, 1.442695
  %v762 = vpow.pop %v761
  %v763 = vadd.f32 %v748, 1.0
  %v764 = vadd.f32 %v750, 1.0
  %v765 = vadd.f32 %v752, 1.0
  %v766 = vadd.f32 %v754, 1.0
  %v767 = vadd.f32 %v756, 1.0
  %v768 = vadd.f32 %v758, 1.0
  %v769 = vadd.f32 %v760, 1.0
  %v770 = vadd.f32 %v762, 1.0
  %v771 = vrcp.pop %v763
  %v772 = vmul.f32 1.0, %v771
  %v773 = vrcp.pop %v764
  %v774 = vmul.f32 1.0, %v773
  %v775 = vrcp.pop %v765
  %v776 = vmul.f32 1.0, %v775
  %v777 = vrcp.pop %v766
  %v778 = vmul.f32 1.0, %v777
  %v779 = vrcp.pop %v767
  %v780 = vmul.f32 1.0, %v779
  %v781 = vrcp.pop %v768
  %v782 = vmul.f32 1.0, %v781
  %v783 = vrcp.pop %v769
  %v784 = vmul.f32 1.0, %v783
  %v785 = vrcp.pop %v770
  %v786 = vmul.f32 1.0, %v785
  %vm787 = vcmask 588800
  %788 = vst.msk [vmem:[%s8] sm:$0xff] %vm787, %v772
  %789 = vst.msk [vmem:[%s8 + $0x8] sm:$0xff] %vm787, %v774
  %790 = vst.msk [vmem:[%s8 + $0x10] sm:$0xff] %vm787, %v776
  %791 = vst.msk [vmem:[%s8 + $0x18] sm:$0xff] %vm787, %v778
  %792 = vst.msk [vmem:[%s8 + $0x20] sm:$0xff] %vm787, %v780
  %793 = vst.msk [vmem:[%s8 + $0x28] sm:$0xff] %vm787, %v782
  %794 = vst.msk [vmem:[%s8 + $0x30] sm:$0xff] %vm787, %v784
  %795 = vst.msk [vmem:[%s8 + $0x38] sm:$0xff] %vm787, %v786
  // Predicated region
  $region30: #{efficientdet_forward.1} parent=0 // pred_check
    _
  $region31: #{efficientdet_forward.1} parent=0 // pred_check_branch
    %797 = sbr.rel (0) target = $region33
  $region32: #{efficientdet_forward.1} parent=0 // pred_region
    _
  $region33: #{efficientdet_forward.1} parent=0 // pred_fallthru
    _
  // Predicated region
  $region34: #{efficientdet_forward.1} parent=0 // pred_check
    _
  $region35: #{efficientdet_forward.1} parent=0 // pred_check_branch
    %799 = sbr.rel (0) target = $region37
  $region36: #{efficientdet_forward.1} parent=0 // pred_region
    _
  $region37: #{efficientdet_forward.1} parent=0 // pred_fallthru
    _
  // Predicated region
  $region38: #{efficientdet_forward.1} parent=0 // pred_check
    _
  $region39: #{efficientdet_forward.1} parent=0 // pred_check_branch
    %801 = sbr.rel (0) target = $region41
  $region40: #{efficientdet_forward.1} parent=0 // pred_region
    _
  $region41: #{efficientdet_forward.1} parent=0 // pred_fallthru
    _
  // Predicated region
  $region42: #{efficientdet_forward.1} parent=0 // pred_check
    _
  $region43: #{efficientdet_forward.1} parent=0 // pred_check_branch
    %803 = sbr.rel (0) target = $region45
  $region44: #{efficientdet_forward.1} parent=0 // pred_region
    _
  $region45: #{efficientdet_forward.1} parent=0 // pred_fallthru
    _

</llo_original>
